<compile_context>
chip_gen: v7x
topology: tpu7x:2x2x1
jax: 0.10.0
libtpu: 0.0.40
codegen_flags: <defaults>
</compile_context>

<pallas_src>
import math

import jax
import jax.numpy as jnp
from jax.experimental import pallas as pl
from jax.experimental.pallas import tpu as pltpu

LN_EPS = 1e-12                      # ESM1bLayerNorm default eps
_INV_SQRT2 = 1.0 / math.sqrt(2.0)


def _round_up(x, m):
    return ((x + m - 1) // m) * m


def _lm_head_kernel(x_ref, w1_ref, b1_ref, g_ref, beta_ref, w2_ref, b2_ref,
                    o_ref, h_ref):
    # Grid: (row tiles i, vocab tiles j); j innermost. The hidden
    # (dense -> gelu -> LN) depends only on the row tile, so compute it once
    # per row tile and keep it resident in VMEM scratch for all vocab tiles.
    @pl.when(pl.program_id(1) == 0)
    def _():
        # x already bf16 (cast in wrapper) -> straight into the MXU, f32 acc.
        h = jnp.dot(x_ref[...], w1_ref[...], preferred_element_type=jnp.float32)
        h = h + b1_ref[...]
        # exact gelu: x * 0.5 * (1 + erf(x / sqrt(2)))  (matches torch.erf form)
        h = h * 0.5 * (1.0 + jax.lax.erf(h * _INV_SQRT2))
        # LayerNorm over last dim, eps=1e-12, affine (all in f32)
        mu = jnp.mean(h, axis=-1, keepdims=True)
        var = jnp.mean(jnp.square(h - mu), axis=-1, keepdims=True)
        h = (h - mu) * jax.lax.rsqrt(var + LN_EPS)
        h = h * g_ref[...] + beta_ref[...]
        h_ref[...] = h.astype(jnp.bfloat16)          # bf16 hidden, reused over j

    # out_proj tile: bf16 x bf16 -> f32 accumulate; b2 folds out_proj.bias + extra bias
    out = jnp.dot(h_ref[...], w2_ref[...], preferred_element_type=jnp.float32)
    out = out + b2_ref[...]
    o_ref[...] = out.astype(o_ref.dtype)


def _device_kind():
    try:
        return jax.devices()[0].device_kind.lower()
    except Exception:
        return ""


def _pick_vmem_limit(kind):
    """Generation-aware scoped-VMEM limit (bytes)."""
    phys = None
    try:
        phys = int(pltpu.get_tpu_info().vmem_capacity_bytes)
    except Exception:
        phys = None
    if phys is None:
        if "v7" in kind:
            phys = 64 << 20
        elif "v6" in kind or "v5" in kind:
            phys = 128 << 20
        else:
            phys = 64 << 20            # conservative default (unknown chip)
    limit = max(32 << 20, (phys * 3) // 4)
    if "v7" in kind:                   # leave headroom under v7x's 64 MiB/TC
        limit = min(limit, 56 << 20)
    return int(min(limit, 100 << 20))


def _vmem_estimate(tm, tv, E, out_bytes):
    """Rough double-buffered working-set estimate (bytes)."""
    x_buf = 2 * tm * E * 2                              # bf16 x tiles
    w1_buf = 2 * E * E * 2                              # bf16 dense weight
    vec_buf = 2 * 3 * 8 * _round_up(E, 128) * 4         # b1, gamma, beta (padded)
    w2_buf = 2 * E * tv * 2                             # bf16 out_proj tile
    b2_buf = 2 * 8 * _round_up(tv, 128) * 4             # folded bias tile
    out_buf = 2 * tm * tv * out_bytes                   # output tiles
    h_buf = tm * E * 2                                  # bf16 hidden scratch
    return x_buf + w1_buf + vec_buf + w2_buf + b2_buf + out_buf + h_buf


def _pick_tiles(N_pad, E, V_pad, vmem_limit, kind, out_bytes, row_tile, vocab_tile):
    is_v7 = "v7" in kind
    budget = int(0.70 * vmem_limit)     # headroom for compiler-internal scratch

    # --- row tile ------------------------------------------------------------
    if row_tile is not None:
        tm = min(_round_up(int(row_tile), 16), _round_up(N_pad, 16))
    else:
        if "v6" in kind:
            tm = 1024       # flips inner loop to MXU-bound on v6e
        elif "v5" in kind:
            tm = 256        # already covers the w2 stream on v5e
        elif is_v7:
            tm = 512
        else:
            tm = 512
        tm = min(tm, _round_up(N_pad, 16))
        # v7x has 2 TensorCores: make sure the parallel row axis has >= 2 tiles.
        if is_v7:
            while tm > 16 and pl.cdiv(N_pad, tm) < 2:
                tm = _round_up(max(16, tm // 2), 16)

    # --- vocab tile -----------------------------------------------------------
    if vocab_tile is not None:
        tv = min(_round_up(int(vocab_tile), 128), V_pad)
    else:
        # Prefer a fully-resident w2 (constant block index -> one DMA total).
        if _vmem_estimate(tm, V_pad, E, out_bytes) <= budget:
            tv = V_pad
        else:
            tv = min(1024, V_pad)

    # --- shrink until the working set fits the budget -------------------------
    while _vmem_estimate(tm, tv, E, out_bytes) > budget and tv > 128:
        tv = max(128, _round_up(tv // 2, 128))
    while _vmem_estimate(tm, tv, E, out_bytes) > budget and tm > 16:
        tm = _round_up(max(16, tm // 2), 16)
    return tm, tv


def rna_2d_roberta_lm_head(features, params, *, row_tile=None, vocab_tile=None,
                           out_dtype=None):
    """features: [B, S, E] -> logits [B, S, V]."""
    B, S, E = features.shape
    V = params["w2"].shape[1]
    N = B * S

    out_dtype = features.dtype if out_dtype is None else out_dtype
    out_bytes = jnp.dtype(out_dtype).itemsize

    # Pad rows only to the bf16 sublane multiple and vocab only to the lane
    # multiple; partial edge blocks are handled by cdiv grids (row-wise math is
    # independent per row, OOB output writes are masked).
    N_pad = _round_up(N, 16)
    V_pad = _round_up(V, 128)

    kind = _device_kind()
    vmem_limit = _pick_vmem_limit(kind)
    tm, tv = _pick_tiles(N_pad, E, V_pad, vmem_limit, kind, out_bytes,
                         row_tile, vocab_tile)

    # bf16 activations over the wire: halves x HBM->VMEM traffic + VMEM footprint.
    x2d = features.reshape(N, E).astype(jnp.bfloat16)
    if N_pad != N:
        x2d = jnp.pad(x2d, ((0, N_pad - N), (0, 0)))

    w1 = params["w1"].astype(jnp.bfloat16)
    b1 = params["b1"].reshape(1, E).astype(jnp.float32)
    g = params["ln_g"].reshape(1, E).astype(jnp.float32)
    beta = params["ln_b"].reshape(1, E).astype(jnp.float32)
    w2 = params["w2"].astype(jnp.bfloat16)
    b2 = params["b2_total"].reshape(1, V).astype(jnp.float32)
    if V_pad != V:
        w2 = jnp.pad(w2, ((0, 0), (0, V_pad - V)))
        b2 = jnp.pad(b2, ((0, 0), (0, V_pad - V)))

    grid = (pl.cdiv(N_pad, tm), pl.cdiv(V_pad, tv))

    out2d = pl.pallas_call(
        _lm_head_kernel,
        out_shape=jax.ShapeDtypeStruct((N_pad, V_pad), out_dtype),
        grid_spec=pltpu.PrefetchScalarGridSpec(
            num_scalar_prefetch=0,
            grid=grid,
            in_specs=[
                pl.BlockSpec((tm, E), lambda i, j: (i, 0)),    # x row tile (bf16)
                pl.BlockSpec((E, E), lambda i, j: (0, 0)),     # dense weight (bf16)
                pl.BlockSpec((1, E), lambda i, j: (0, 0)),     # dense bias
                pl.BlockSpec((1, E), lambda i, j: (0, 0)),     # LN gamma
                pl.BlockSpec((1, E), lambda i, j: (0, 0)),     # LN beta
                pl.BlockSpec((E, tv), lambda i, j: (0, j)),    # out_proj weight tile
                pl.BlockSpec((1, tv), lambda i, j: (0, j)),    # out_proj bias + extra bias
            ],
            out_specs=pl.BlockSpec((tm, tv), lambda i, j: (i, j)),
            scratch_shapes=[pltpu.VMEM((tm, E), jnp.bfloat16)],  # LN'd hidden, reused over j
        ),
        compiler_params=pltpu.CompilerParams(
            dimension_semantics=("parallel", "arbitrary"),
            vmem_limit_bytes=int(vmem_limit)),
    )(x2d, w1, b1, g, beta, w2, b2)

    return out2d[:N, :V].reshape(B, S, V)


def init_params(key, embed_dim, output_dim, dtype=jnp.float32):
    """Deterministic synthetic params matching the PyTorch module's shapes."""
    k1, k2, k3, k4 = jax.random.split(key, 4)
    scale1 = 1.0 / math.sqrt(embed_dim)
    w1 = jax.random.uniform(k1, (embed_dim, embed_dim), dtype, -scale1, scale1)
    b1 = jax.random.uniform(k2, (embed_dim,), dtype, -scale1, scale1)
    ln_g = jnp.ones((embed_dim,), dtype)
    ln_b = jnp.zeros((embed_dim,), dtype)
    w2 = jax.random.uniform(k3, (embed_dim, output_dim), dtype, -scale1, scale1)
    b2 = jax.random.uniform(k4, (output_dim,), dtype, -scale1, scale1)
    extra_bias = jnp.zeros((output_dim,), dtype)   # self.bias in the module (init zeros)
    return {
        "w1": w1, "b1": b1,
        "ln_g": ln_g, "ln_b": ln_b,
        "w2": w2,
        "b2_total": b2 + extra_bias,
    }


def reference_jax(features, params):
    """Pure-JAX reference with the same bf16 operand quantization as the kernel."""
    def q(a):  # round to bf16 like the kernel's MXU operands, accumulate in f32
        return a.astype(jnp.bfloat16).astype(jnp.float32)

    x = features.astype(jnp.float32)
    h = q(x) @ q(params["w1"]) + params["b1"].astype(jnp.float32)
    h = h * 0.5 * (1.0 + jax.lax.erf(h * _INV_SQRT2))
    mu = jnp.mean(h, axis=-1, keepdims=True)
    var = jnp.mean(jnp.square(h - mu), axis=-1, keepdims=True)
    h = (h - mu) * jax.lax.rsqrt(var + LN_EPS)
    h = h * params["ln_g"] + params["ln_b"]
    return q(h) @ q(params["w2"]) + params["b2_total"].astype(jnp.float32)


def _check(features, params, **kw):
    out = jax.block_until_ready(rna_2d_roberta_lm_head(features, params, **kw))
    ref = reference_jax(features, params)
    B, S, _ = features.shape
    V = params["w2"].shape[1]
    assert out.shape == (B, S, V)
    assert jnp.allclose(out.astype(jnp.float32), ref, atol=2e-3, rtol=2e-3), \
        "mismatch vs reference"


if __name__ == "__main__":
    key = jax.random.PRNGKey(0)
    kx1, kp1, kx2, kp2 = jax.random.split(key, 4)

    # Test 1: small default shapes (auto tiling -> single grid step).
    B, S, E, V = 2, 8, 32, 64
    features = jax.random.normal(kx1, (B, S, E), jnp.float32)
    params = init_params(kp1, E, V)
    _check(features, params)

    # Test 2: forces a multi-tile grid (2x2) with a partial last row block and
    # vocab padding, exercising pipelining, scratch reuse across j and masking.
    B2, S2, E2, V2 = 2, 21, 32, 200          # N=42 -> N_pad=48, V_pad=256
    features2 = jax.random.normal(kx2, (B2, S2, E2), jnp.float32)
    params2 = init_params(kp2, E2, V2)
    _check(features2, params2, row_tile=32, vocab_tile=128)

    print("KERNEL_OK")
</pallas_src>

<mosaic_0001>
module attributes {stable_mosaic.version = 11 : i64} {
  func.func @_lm_head_kernel(%arg0: i32, %arg1: i32, %arg2: memref<16x32xbf16, #tpu.memory_space<vmem>>, %arg3: memref<32x32xbf16, #tpu.memory_space<vmem>>, %arg4: memref<1x32xf32, #tpu.memory_space<vmem>>, %arg5: memref<1x32xf32, #tpu.memory_space<vmem>>, %arg6: memref<1x32xf32, #tpu.memory_space<vmem>>, %arg7: memref<32x128xbf16, #tpu.memory_space<vmem>>, %arg8: memref<1x128xf32, #tpu.memory_space<vmem>>, %arg9: memref<16x128xf32, #tpu.memory_space<vmem>>, %arg10: memref<16x32xbf16, #tpu.memory_space<vmem>>) attributes {dimension_semantics = [#tpu.dimension_semantics<parallel>, #tpu.dimension_semantics<arbitrary>], iteration_bounds = array<i64: 1, 1>, scalar_prefetch = 0 : i64, scratch_operands = 1 : i64, tpu.core_type = #tpu.core_type<tc>, window_params = [{transform_indices = @transform_0, window_bounds = array<i64: 16, 32>}, {pipeline_mode = #tpu.pipeline_mode<synchronous>, transform_indices = @transform_1, window_bounds = array<i64: 32, 32>}, {pipeline_mode = #tpu.pipeline_mode<synchronous>, transform_indices = @transform_2, window_bounds = array<i64: 1, 32>}, {pipeline_mode = #tpu.pipeline_mode<synchronous>, transform_indices = @transform_3, window_bounds = array<i64: 1, 32>}, {pipeline_mode = #tpu.pipeline_mode<synchronous>, transform_indices = @transform_4, window_bounds = array<i64: 1, 32>}, {transform_indices = @transform_5, window_bounds = array<i64: 32, 128>}, {transform_indices = @transform_6, window_bounds = array<i64: 1, 128>}, {transform_indices = @transform_7, window_bounds = array<i64: 16, 128>}]} {
    %c0_i32 = arith.constant 0 : i32
    %0 = arith.cmpi eq, %arg1, %c0_i32 : i32
    %1 = arith.extui %0 : i1 to i32
    %c0_i32_0 = arith.constant 0 : i32
    %2 = arith.cmpi ne, %1, %c0_i32_0 : i32
    scf.if %2 {
      %c0_8 = arith.constant 0 : index
      %c0_9 = arith.constant 0 : index
      %10 = vector.load %arg2[%c0_8, %c0_9] : memref<16x32xbf16, #tpu.memory_space<vmem>>, vector<16x32xbf16>
      %c0_10 = arith.constant 0 : index
      %c0_11 = arith.constant 0 : index
      %11 = vector.load %arg3[%c0_10, %c0_11] : memref<32x32xbf16, #tpu.memory_space<vmem>>, vector<32x32xbf16>
      %cst_12 = arith.constant dense<0.000000e+00> : vector<16x32xf32>
      %12 = tpu.matmul %10, %11, %cst_12 {dimension_numbers = #tpu.dot_dimension_numbers<[1], [0], [0], [1], [0, 0, 1, 1], [], []>} : vector<16x32xbf16>, vector<32x32xbf16>, vector<16x32xf32> -> vector<16x32xf32>
      %c0_13 = arith.constant 0 : index
      %c0_14 = arith.constant 0 : index
      %13 = vector.load %arg4[%c0_13, %c0_14] : memref<1x32xf32, #tpu.memory_space<vmem>>, vector<1x32xf32>
      %14 = vector.broadcast %13 : vector<1x32xf32> to vector<16x32xf32>
      %15 = arith.addf %12, %14 : vector<16x32xf32>
      %cst_15 = arith.constant 5.000000e-01 : f32
      %16 = vector.broadcast %cst_15 : f32 to vector<16x32xf32>
      %17 = arith.mulf %15, %16 : vector<16x32xf32>
      %cst_16 = arith.constant 0.707106769 : f32
      %18 = vector.broadcast %cst_16 : f32 to vector<16x32xf32>
      %19 = arith.mulf %15, %18 : vector<16x32xf32>
      %20 = math.erf %19 : vector<16x32xf32>
      %cst_17 = arith.constant 1.000000e+00 : f32
      %21 = vector.broadcast %cst_17 : f32 to vector<16x32xf32>
      %22 = arith.addf %21, %20 : vector<16x32xf32>
      %23 = arith.mulf %17, %22 : vector<16x32xf32>
      %cst_18 = arith.constant dense<0.000000e+00> : vector<16xf32>
      %24 = vector.multi_reduction <add>, %23, %cst_18 [1] : vector<16x32xf32> to vector<16xf32>
      %25 = vector.shape_cast %24 : vector<16xf32> to vector<16x1xf32>
      %cst_19 = arith.constant 3.200000e+01 : f32
      %26 = vector.broadcast %cst_19 : f32 to vector<16x1xf32>
      %27 = arith.divf %25, %26 : vector<16x1xf32>
      %28 = vector.broadcast %27 : vector<16x1xf32> to vector<16x32xf32>
      %29 = arith.subf %23, %28 : vector<16x32xf32>
      %30 = arith.mulf %29, %29 : vector<16x32xf32>
      %cst_20 = arith.constant dense<0.000000e+00> : vector<16xf32>
      %31 = vector.multi_reduction <add>, %30, %cst_20 [1] : vector<16x32xf32> to vector<16xf32>
      %32 = vector.shape_cast %31 : vector<16xf32> to vector<16x1xf32>
      %cst_21 = arith.constant 3.200000e+01 : f32
      %33 = vector.broadcast %cst_21 : f32 to vector<16x1xf32>
      %34 = arith.divf %32, %33 : vector<16x1xf32>
      %35 = vector.broadcast %27 : vector<16x1xf32> to vector<16x32xf32>
      %36 = arith.subf %23, %35 : vector<16x32xf32>
      %cst_22 = arith.constant 9.99999996E-13 : f32
      %37 = vector.broadcast %cst_22 : f32 to vector<16x1xf32>
      %38 = arith.addf %34, %37 : vector<16x1xf32>
      %39 = math.rsqrt %38 : vector<16x1xf32>
      %40 = vector.broadcast %39 : vector<16x1xf32> to vector<16x32xf32>
      %41 = arith.mulf %36, %40 : vector<16x32xf32>
      %c0_23 = arith.constant 0 : index
      %c0_24 = arith.constant 0 : index
      %42 = vector.load %arg5[%c0_23, %c0_24] : memref<1x32xf32, #tpu.memory_space<vmem>>, vector<1x32xf32>
      %43 = vector.broadcast %42 : vector<1x32xf32> to vector<16x32xf32>
      %44 = arith.mulf %41, %43 : vector<16x32xf32>
      %c0_25 = arith.constant 0 : index
      %c0_26 = arith.constant 0 : index
      %45 = vector.load %arg6[%c0_25, %c0_26] : memref<1x32xf32, #tpu.memory_space<vmem>>, vector<1x32xf32>
      %46 = vector.broadcast %45 : vector<1x32xf32> to vector<16x32xf32>
      %47 = arith.addf %44, %46 : vector<16x32xf32>
      %48 = arith.truncf %47 : vector<16x32xf32> to vector<16x32xbf16>
      %c0_27 = arith.constant 0 : index
      %c0_28 = arith.constant 0 : index
      %49 = vector.load %arg10[%c0_27, %c0_28] : memref<16x32xbf16, #tpu.memory_space<vmem>>, vector<16x32xbf16>
      tpu.vector_store %arg10[%c0_27, %c0_28], %48 {strides = array<i32>} : memref<16x32xbf16, #tpu.memory_space<vmem>>, vector<16x32xbf16>,
    } else {
    }
    %c0 = arith.constant 0 : index
    %c0_1 = arith.constant 0 : index
    %3 = vector.load %arg10[%c0, %c0_1] : memref<16x32xbf16, #tpu.memory_space<vmem>>, vector<16x32xbf16>
    %c0_2 = arith.constant 0 : index
    %c0_3 = arith.constant 0 : index
    %4 = vector.load %arg7[%c0_2, %c0_3] : memref<32x128xbf16, #tpu.memory_space<vmem>>, vector<32x128xbf16>
    %cst = arith.constant dense<0.000000e+00> : vector<16x128xf32>
    %5 = tpu.matmul %3, %4, %cst {dimension_numbers = #tpu.dot_dimension_numbers<[1], [0], [0], [1], [0, 0, 1, 1], [], []>} : vector<16x32xbf16>, vector<32x128xbf16>, vector<16x128xf32> -> vector<16x128xf32>
    %c0_4 = arith.constant 0 : index
    %c0_5 = arith.constant 0 : index
    %6 = vector.load %arg8[%c0_4, %c0_5] : memref<1x128xf32, #tpu.memory_space<vmem>>, vector<1x128xf32>
    %7 = vector.broadcast %6 : vector<1x128xf32> to vector<16x128xf32>
    %8 = arith.addf %5, %7 : vector<16x128xf32>
    %c0_6 = arith.constant 0 : index
    %c0_7 = arith.constant 0 : index
    %9 = vector.load %arg9[%c0_6, %c0_7] : memref<16x128xf32, #tpu.memory_space<vmem>>, vector<16x128xf32>
    tpu.vector_store %arg9[%c0_6, %c0_7], %8 {strides = array<i32>} : memref<16x128xf32, #tpu.memory_space<vmem>>, vector<16x128xf32>,
    return
  }
  func.func @transform_0(%arg0: i32, %arg1: i32) -> (i32, i32) {
    %c0_i32 = arith.constant 0 : i32
    %c0_i32_0 = arith.constant 0 : i32
    return %arg0, %c0_i32 : i32, i32
  }
  func.func @transform_1(%arg0: i32, %arg1: i32) -> (i32, i32) {
    %c0_i32 = arith.constant 0 : i32
    %c0_i32_0 = arith.constant 0 : i32
    %c0_i32_1 = arith.constant 0 : i32
    return %c0_i32, %c0_i32_0 : i32, i32
  }
  func.func @transform_2(%arg0: i32, %arg1: i32) -> (i32, i32) {
    %c0_i32 = arith.constant 0 : i32
    %c0_i32_0 = arith.constant 0 : i32
    %c0_i32_1 = arith.constant 0 : i32
    return %c0_i32, %c0_i32_0 : i32, i32
  }
  func.func @transform_3(%arg0: i32, %arg1: i32) -> (i32, i32) {
    %c0_i32 = arith.constant 0 : i32
    %c0_i32_0 = arith.constant 0 : i32
    %c0_i32_1 = arith.constant 0 : i32
    return %c0_i32, %c0_i32_0 : i32, i32
  }
  func.func @transform_4(%arg0: i32, %arg1: i32) -> (i32, i32) {
    %c0_i32 = arith.constant 0 : i32
    %c0_i32_0 = arith.constant 0 : i32
    %c0_i32_1 = arith.constant 0 : i32
    return %c0_i32, %c0_i32_0 : i32, i32
  }
  func.func @transform_5(%arg0: i32, %arg1: i32) -> (i32, i32) {
    %c0_i32 = arith.constant 0 : i32
    %c0_i32_0 = arith.constant 0 : i32
    return %c0_i32, %arg1 : i32, i32
  }
  func.func @transform_6(%arg0: i32, %arg1: i32) -> (i32, i32) {
    %c0_i32 = arith.constant 0 : i32
    %c0_i32_0 = arith.constant 0 : i32
    return %c0_i32, %arg1 : i32, i32
  }
  func.func @transform_7(%arg0: i32, %arg1: i32) -> (i32, i32) {
    %c0_i32 = arith.constant 0 : i32
    return %arg0, %arg1 : i32, i32
  }
}

</mosaic_0001>

<llo_original>
// kernel: tpu_custom_call.1
$region0: #{tpu_custom_call.1}
  #allocation0 [shape = 'u32[]', space=smem, size = 0x4, offset = 0x4, fixed_abs, tag = 'smem constant byte address 0x4 - core index']
  #allocation1 [shape = 'u32[144,128]{1,0:T(1,128)}', space=vmem, size = 0x12000, scoped, tag = 'internal scratch']
  #allocation2 [shape = 'bf16[16,32]{1,0:T(16,128)(2,1)}', space=vmem, size = 0x1000, scoped, tag = 'scratch operand']
  %s0 = inlined_call_operand.hbm [shape: bf16[16,32], index: 0, kind: input, shape index: {}]
  %s1 = inlined_call_operand.hbm [shape: bf16[32,32], index: 1, kind: input, shape index: {}]
  %s2 = inlined_call_operand.vmem [shape: f32[1,32], index: 2, kind: input, shape index: {}]
  %s3 = inlined_call_operand.vmem [shape: f32[1,32], index: 3, kind: input, shape index: {}]
  %s4 = inlined_call_operand.hbm [shape: f32[1,32], index: 4, kind: input, shape index: {}]
  %s5 = inlined_call_operand.vmem [shape: bf16[32,128], index: 5, kind: input, shape index: {}]
  %s6 = inlined_call_operand.vmem [shape: f32[1,128], index: 6, kind: input, shape index: {}]
  %s7 = inlined_call_operand.hbm [shape: f32[16,128], index: 7, kind: output, shape index: {}]
  %s8 = sld [smem:[#allocation0]]
  $region54: #{tpu_custom_call.1} parent=0
    _
  %s10 = ssub.s32 1, %s8
  %s11 = scalar_select 0, %s10, %s8
  $region1: #{tpu_custom_call.1} parent=0
    #allocation3 [shape = 'u8[4096]{0}', space=vmem, size = 0x1000, scoped, tag = 'input window, operand 0, single buffered']
    #allocation4 [shape = 's32[1]{0}', space=sflag, size = 0x4, scoped, tag = 'scoped memory for tpu_custom_call.1']
    #allocation5 [shape = 's32[1]{0}', space=sflag, size = 0x4, scoped, tag = 'scoped memory for tpu_custom_call.1']
    #allocation6 [shape = 'u8[8192]{0}', space=vmem, size = 0x2000, scoped, tag = 'input window, operand 1, single buffered']
    #allocation7 [shape = 's32[1]{0}', space=sflag, size = 0x4, scoped, tag = 'scoped memory for tpu_custom_call.1']
    #allocation8 [shape = 'u8[512]{0}', space=vmem, size = 0x400, scoped, tag = 'input window, operand 4, single buffered']
    #allocation9 [shape = 'u8[8192]{0}', space=vmem, size = 0x2000, scoped, tag = 'output window, operand 0, single buffered']
    %12 = vsyncpa [#allocation4], 0
    %13 = vsyncpa [#allocation7], 0
    %14 = vsyncpa [#allocation5], 0
    // Predicated region
    $region2: #{tpu_custom_call.1} parent=1 // pred_check
      _
    $region3: #{tpu_custom_call.1} parent=1 // pred_check_branch
      %16 = sbr.rel (0) target = $region5
    $region4: #{tpu_custom_call.1} parent=1 // pred_region
      %s18 = ssub.s32 128, 128
      %19 = vsyncadd [#allocation4], %s18
      %s20 = sshll.u32 [#allocation3], 4
      %s21 = int_to_ptr.vmem [resolvable:$true] %s20
      %26 = dma.hbm_to_vmem [thread:$0]  %s0, 128, %s21, [#allocation4], 64, 64, 4
    $region5: #{tpu_custom_call.1} parent=1 // pred_fallthru
      _
    // Predicated region
    $region6: #{tpu_custom_call.1} parent=1 // pred_check
      _
    $region7: #{tpu_custom_call.1} parent=1 // pred_check_branch
      %28 = sbr.rel (0) target = $region9
    $region8: #{tpu_custom_call.1} parent=1 // pred_region
      %s30 = ssub.s32 256, 256
      %31 = vsyncadd [#allocation7], %s30
      %s32 = sshll.u32 [#allocation6], 4
      %s33 = int_to_ptr.vmem [resolvable:$true] %s32
      %38 = dma.hbm_to_vmem [thread:$0]  %s1, 256, %s33, [#allocation7], 64, 64, 4
    $region9: #{tpu_custom_call.1} parent=1 // pred_fallthru
      _
    // Predicated region
    $region10: #{tpu_custom_call.1} parent=1 // pred_check
      _
    $region11: #{tpu_custom_call.1} parent=1 // pred_check_branch
      %40 = sbr.rel (0) target = $region13
    $region12: #{tpu_custom_call.1} parent=1 // pred_region
      _
    $region13: #{tpu_custom_call.1} parent=1 // pred_fallthru
      _
    // Predicated region
    $region14: #{tpu_custom_call.1} parent=1 // pred_check
      _
    $region15: #{tpu_custom_call.1} parent=1 // pred_check_branch
      %42 = sbr.rel (0) target = $region17
    $region16: #{tpu_custom_call.1} parent=1 // pred_region
      _
    $region17: #{tpu_custom_call.1} parent=1 // pred_fallthru
      _
    // Predicated region
    $region18: #{tpu_custom_call.1} parent=1 // pred_check
      _
    $region19: #{tpu_custom_call.1} parent=1 // pred_check_branch
      %44 = sbr.rel (0) target = $region21
    $region20: #{tpu_custom_call.1} parent=1 // pred_region
      %s46 = ssub.s32 16, 16
      %47 = vsyncadd [#allocation7], %s46
      %s49 = sshll.u32 [#allocation8], 4
      %s50 = int_to_ptr.vmem [resolvable:$true] %s49
      %52 = dma.hbm_to_vmem [thread:$0]  %s4, 16, %s50, [#allocation7]
    $region21: #{tpu_custom_call.1} parent=1 // pred_fallthru
      _
    // Predicated region
    $region22: #{tpu_custom_call.1} parent=1 // pred_check
      _
    $region23: #{tpu_custom_call.1} parent=1 // pred_check_branch
      %54 = sbr.rel (0) target = $region25
    $region24: #{tpu_custom_call.1} parent=1 // pred_region
      _
    $region25: #{tpu_custom_call.1} parent=1 // pred_fallthru
      _
    // Predicated region
    $region26: #{tpu_custom_call.1} parent=1 // pred_check
      _
    $region27: #{tpu_custom_call.1} parent=1 // pred_check_branch
      %56 = sbr.rel (0) target = $region29
    $region28: #{tpu_custom_call.1} parent=1 // pred_region
      _
    $region29: #{tpu_custom_call.1} parent=1 // pred_fallthru
      _
    // Predicated region
    $region30: #{tpu_custom_call.1} parent=1 // pred_check
      _
    $region31: #{tpu_custom_call.1} parent=1 // pred_check_branch
      %58 = sbr.rel (0) target = $region33
    $region32: #{tpu_custom_call.1} parent=1 // pred_region
      %59 = dma.done [#allocation4], 128
    $region33: #{tpu_custom_call.1} parent=1 // pred_fallthru
      _
    // Predicated region
    $region34: #{tpu_custom_call.1} parent=1 // pred_check
      _
    $region35: #{tpu_custom_call.1} parent=1 // pred_check_branch
      %61 = sbr.rel (0) target = $region37
    $region36: #{tpu_custom_call.1} parent=1 // pred_region
      %62 = dma.done [#allocation7], 256
    $region37: #{tpu_custom_call.1} parent=1 // pred_fallthru
      _
    // Predicated region
    $region38: #{tpu_custom_call.1} parent=1 // pred_check
      _
    $region39: #{tpu_custom_call.1} parent=1 // pred_check_branch
      %64 = sbr.rel (0) target = $region41
    $region40: #{tpu_custom_call.1} parent=1 // pred_region
      %65 = dma.done [#allocation7], 16
    $region41: #{tpu_custom_call.1} parent=1 // pred_fallthru
      _
    %p67 = scmp.eq.s32.totalorder 0, 0
    // Predicated region
    $region42: #{tpu_custom_call.1} parent=1 // pred_check
      %p68 = pneg %p67
    $region43: #{tpu_custom_call.1} parent=1 // pred_check_branch
      %70 = sbr.rel (%p68) target = $region45
    $region44: #{tpu_custom_call.1} parent=1 // pred_region
      %v71 = vld [vmem:[#allocation3] sm:$0xf]
      %v72 = vld [vmem:[#allocation3 + $0x4] sm:$0xf]
      %v73 = vld [vmem:[#allocation6] sm:$0xf]
      %v74 = vld [vmem:[#allocation6 + $0x4] sm:$0xf]
      %v75 = vld [vmem:[#allocation6 + $0x8] sm:$0xf]
      %v76 = vld [vmem:[#allocation6 + $0xc] sm:$0xf]
      %v77 = vld [vmem:[%s2] sm:$0x1]
      %v79 = vlaneseq
      %v80 = vshrl.u32 %v79, 7
      %v81 = vsub.s32 0, %v80
      %v82 = vrot.slane %v77, %v81
      %v86 = vunpack.c.l.b16 %v71
      %v87 = vunpack.c.l.b16 %v72
      %v88 = vpack.c.b16 %v87, %v86
      %v93 = vunpack.c.l.b16 %v73
      %v94 = vunpack.c.l.b16 %v74
      %v95 = vunpack.c.l.b16 %v75
      %v96 = vunpack.c.l.b16 %v76
      %v97 = vpack.c.b16 %v94, %v93
      %v98 = vpack.c.b16 %v96, %v95
      %vm101 = vcmask 261120
      %v103 = vsel %vm101, %v88, 0
      %105 = vmatprep.subr.bf16.mxu0 0
      %106 = vmatpush1.bf16.msra.mxu0 %v97
      %107 = vmatprep.subr.bf16.mxu0 0
      %108 = vmatpush1.bf16.msra.mxu0 %v98
      %109 = vmatprep.subr.bf16.mxu0 0
      %110 = vmatpush1.bf16.msra.mxu0 0
      %111 = vmatprep.subr.bf16.mxu0 0
      %112 = vmatpush1.bf16.msra.mxu0 0
      %113 = vmatprep.subr.bf16.mxu0 0
      %114 = vmatpush1.bf16.msra.mxu0 0
      %115 = vmatprep.subr.bf16.mxu0 0
      %116 = vmatpush1.bf16.msra.mxu0 0
      %117 = vmatprep.subr.bf16.mxu0 0
      %118 = vmatpush1.bf16.msra.mxu0 0
      %119 = vmatprep.subr.bf16.mxu0 0
      %120 = vmatpush1.bf16.msra.mxu0 0
      %121 = vmatprep.subr.bf16.mxu0 0
      %122 = vmatpush1.bf16.msra.mxu0 0
      %123 = vmatprep.subr.bf16.mxu0 0
      %124 = vmatpush1.bf16.msra.mxu0 0
      %125 = vmatprep.subr.bf16.mxu0 0
      %126 = vmatpush1.bf16.msra.mxu0 0
      %127 = vmatprep.subr.bf16.mxu0 0
      %128 = vmatpush1.bf16.msra.mxu0 0
      %129 = vmatprep.subr.bf16.mxu0 0
      %130 = vmatpush1.bf16.msra.mxu0 0
      %131 = vmatprep.subr.bf16.mxu0 0
      %132 = vmatpush1.bf16.msra.mxu0 0
      %133 = vmatprep.subr.bf16.mxu0 0
      %134 = vmatpush1.bf16.msra.mxu0 0
      %135 = vmatprep.subr.bf16.mxu0 0
      %136 = vmatpush1.bf16.msra.mxu0 0
      %137 = vmatprep.mubr.bf16.mxu0 0
      %138 = vmatmul.mubr.bf16.gmra.mrb[0].mxu0 %v103
      %v139 = vpop.f32.mrb[0].mxu0
      %v140 = vadd.f32 %v82, %v139
      %v141 = vpop.f32.mrb[0].mxu0
      %v142 = vpop.f32.mrb[0].mxu0
      %v143 = vadd.f32 %v82, %v142
      %v144 = vpop.f32.mrb[0].mxu0
      %145 = vdwg.mxu0
      %v146 = vmul.f32 %v140, 0.5
      %v147 = vmul.f32 %v143, 0.5
      %v148 = vmul.f32 %v140, 0.70710677
      %v149 = vmul.f32 %v143, 0.70710677
      %v150 = verf.f32.pop %v148
      %v151 = verf.f32.pop %v149
      %v152 = vadd.f32 %v150, 1.0
      %v153 = vadd.f32 %v151, 1.0
      %v154 = vmul.f32 %v146, %v152
      %v155 = vmul.f32 %v147, %v153
      %v156 = vsel %vm101, %v154, 0.0
      %157 = vadd.xlane.f32.xlu0 %v156
      %v158 = vpop.xlane.xlu0 %157
      %v159 = vsel %vm101, %v155, 0.0
      %160 = vadd.xlane.f32.xlu0 %v159
      %v161 = vpop.xlane.xlu0 %160
      %v162 = vrcp.pop 32.0
      %v163 = vmul.f32 %v158, %v162
      %v164 = vmul.f32 %v161, %v162
      %v165 = vsub.f32 %v154, %v163
      %v166 = vsub.f32 %v155, %v164
      %v167 = vmul.f32 %v165, %v165
      %v168 = vmul.f32 %v166, %v166
      %v169 = vsel %vm101, %v167, 0.0
      %170 = vadd.xlane.f32.xlu0 %v169
      %v171 = vpop.xlane.xlu0 %170
      %v172 = vsel %vm101, %v168, 0.0
      %173 = vadd.xlane.f32.xlu0 %v172
      %v174 = vpop.xlane.xlu0 %173
      %v175 = vmul.f32 %v171, %v162
      %v176 = vmul.f32 %v174, %v162
      %v177 = vadd.f32 %v175, 1e-12
      %v178 = vadd.f32 %v176, 1e-12
      %v179 = vrsqrt.pop %v177
      %v180 = vrsqrt.pop %v178
      %v181 = vmul.f32 %v165, %v179
      %v182 = vmul.f32 %v166, %v180
      %v183 = vld [vmem:[%s3] sm:$0x1]
      %v185 = vlaneseq
      %v186 = vshrl.u32 %v185, 7
      %v187 = vsub.s32 0, %v186
      %v188 = vrot.slane %v183, %v187
      %v190 = vmul.f32 %v181, %v188
      %v191 = vmul.f32 %v182, %v188
      %v192 = vld [vmem:[#allocation8] sm:$0x1]
      %v194 = vlaneseq
      %v195 = vshrl.u32 %v194, 7
      %v196 = vsub.s32 0, %v195
      %v197 = vrot.slane %v192, %v196
      %v199 = vadd.f32 %v190, %v197
      %v200 = vadd.f32 %v191, %v197
      %v201 = vpack.c.bf16 %v200, %v199
      %202 = vst.msk [vmem:[#allocation2] sm:$0xff] %vm101, %v201
    $region45: #{tpu_custom_call.1} parent=1 // pred_fallthru
      _
    %v203 = vld [vmem:[#allocation2] sm:$0xff]
    %v204 = vld [vmem:[%s5] sm:$0xf]
    %v205 = vld [vmem:[%s5 + $0x4] sm:$0xf]
    %v206 = vld [vmem:[%s5 + $0x8] sm:$0xf]
    %v207 = vld [vmem:[%s5 + $0xc] sm:$0xf]
    %v208 = vld [vmem:[%s6] sm:$0x1]
    %v210 = vlaneseq
    %v211 = vshrl.u32 %v210, 7
    %v212 = vsub.s32 0, %v211
    %v213 = vrot.slane %v208, %v212
    %v219 = vunpack.c.l.b16 %v204
    %v220 = vunpack.c.l.b16 %v205
    %v221 = vunpack.c.l.b16 %v206
    %v222 = vunpack.c.l.b16 %v207
    %v223 = vpack.c.b16 %v220, %v219
    %v224 = vpack.c.b16 %v222, %v221
    %vm227 = vcmask 261120
    %v229 = vsel %vm227, %v203, 0
    %231 = vmatprep.subr.bf16.mxu0 0
    %232 = vmatpush1.bf16.msra.mxu0 %v223
    %233 = vmatprep.subr.bf16.mxu0 0
    %234 = vmatpush1.bf16.msra.mxu0 %v224
    %235 = vmatprep.subr.bf16.mxu0 0
    %236 = vmatpush1.bf16.msra.mxu0 0
    %237 = vmatprep.subr.bf16.mxu0 0
    %238 = vmatpush1.bf16.msra.mxu0 0
    %239 = vmatprep.subr.bf16.mxu0 0
    %240 = vmatpush1.bf16.msra.mxu0 0
    %241 = vmatprep.subr.bf16.mxu0 0
    %242 = vmatpush1.bf16.msra.mxu0 0
    %243 = vmatprep.subr.bf16.mxu0 0
    %244 = vmatpush1.bf16.msra.mxu0 0
    %245 = vmatprep.subr.bf16.mxu0 0
    %246 = vmatpush1.bf16.msra.mxu0 0
    %247 = vmatprep.subr.bf16.mxu0 0
    %248 = vmatpush1.bf16.msra.mxu0 0
    %249 = vmatprep.subr.bf16.mxu0 0
    %250 = vmatpush1.bf16.msra.mxu0 0
    %251 = vmatprep.subr.bf16.mxu0 0
    %252 = vmatpush1.bf16.msra.mxu0 0
    %253 = vmatprep.subr.bf16.mxu0 0
    %254 = vmatpush1.bf16.msra.mxu0 0
    %255 = vmatprep.subr.bf16.mxu0 0
    %256 = vmatpush1.bf16.msra.mxu0 0
    %257 = vmatprep.subr.bf16.mxu0 0
    %258 = vmatpush1.bf16.msra.mxu0 0
    %259 = vmatprep.subr.bf16.mxu0 0
    %260 = vmatpush1.bf16.msra.mxu0 0
    %261 = vmatprep.subr.bf16.mxu0 0
    %262 = vmatpush1.bf16.msra.mxu0 0
    %263 = vmatprep.mubr.bf16.mxu0 0
    %264 = vmatmul.mubr.bf16.gmra.mrb[0].mxu0 %v229
    %v265 = vpop.f32.mrb[0].mxu0
    %v266 = vadd.f32 %v213, %v265
    %v267 = vpop.f32.mrb[0].mxu0
    %v268 = vpop.f32.mrb[0].mxu0
    %v269 = vadd.f32 %v213, %v268
    %v270 = vpop.f32.mrb[0].mxu0
    %271 = vdwg.mxu0
    %272 = vst [vmem:[#allocation9] sm:$0xff] %v266
    %273 = vst [vmem:[#allocation9 + $0x8] sm:$0xff] %v269
    // Predicated region
    $region46: #{tpu_custom_call.1} parent=1 // pred_check
      _
    $region47: #{tpu_custom_call.1} parent=1 // pred_check_branch
      %275 = sbr.rel (0) target = $region49
    $region48: #{tpu_custom_call.1} parent=1 // pred_region
      %s277 = ssub.s32 256, 256
      %278 = vsyncadd [#allocation5], %s277
      %s279 = sshll.u32 [#allocation9], 4
      %s280 = int_to_ptr.vmem [resolvable:$true] %s279
      %285 = dma.vmem_to_hbm [thread:$0]  %s280, 256, %s7, [#allocation5], 128, 128, 8
    $region49: #{tpu_custom_call.1} parent=1 // pred_fallthru
      _
    // Predicated region
    $region50: #{tpu_custom_call.1} parent=1 // pred_check
      _
    $region51: #{tpu_custom_call.1} parent=1 // pred_check_branch
      %287 = sbr.rel (0) target = $region53
    $region52: #{tpu_custom_call.1} parent=1 // pred_region
      %288 = dma.done [#allocation5], 256
    $region53: #{tpu_custom_call.1} parent=1 // pred_fallthru
      _
    %289 = vsyncpa [#allocation4], 1
    %290 = vsyncpa [#allocation7], 1
    %291 = vsyncpa [#allocation5], 1

</llo_original>
